<compile_context>
chip_gen: v5e
topology: v5e:2x2
jax: 0.10.0
libtpu: 0.0.40
codegen_flags: <defaults>
</compile_context>

<pallas_src>
import functools

import jax
import jax.numpy as jnp
from jax import lax
from jax.experimental import pallas as pl
from jax.experimental.pallas import tpu as pltpu

_LANES = 128
_SUBLANES = 8
_CHUNK_ROWS = 256               # inner accumulate chunk; multiple of 8/16/32
_TARGET_BLOCK_BYTES = 4 << 20   # ~4 MiB/input block; x2 inputs x2 buffers = 16 MiB


def _round_up(x, m):
    return (x + m - 1) // m * m


def _sublane_packing(dtype):
    # Rows pack along sublanes for sub-32-bit dtypes: 8 (32b), 16 (16b), 32 (8b).
    itemsize = jnp.dtype(dtype).itemsize
    return _SUBLANES * max(1, 4 // itemsize)


def _choose_block_rows(rows, dtype):
    pack = _sublane_packing(dtype)
    itemsize = jnp.dtype(dtype).itemsize
    max_rows = max(pack, (_TARGET_BLOCK_BYTES // (_LANES * itemsize)) // pack * pack)
    if max_rows >= _CHUNK_ROWS:
        max_rows = max_rows // _CHUNK_ROWS * _CHUNK_ROWS
    if rows > max_rows:
        return max_rows
    # Small/medium inputs: aim for >= 2 blocks so both v7x TensorCores get work.
    half = _round_up(pl.cdiv(rows, 2), pack)
    if half >= _CHUNK_ROWS:
        half = _round_up(half, _CHUNK_ROWS)
    return min(half, max_rows)


def _huber_block_kernel(pred_ref, true_ref, out_ref, *, delta, block_rows,
                        chunk_rows, valid_rows):
    """One grid step: stream a (block_rows, 128) tile per input, reduce to (8,128)."""
    i = pl.program_id(0)
    n_chunks = block_rows // chunk_rows
    delta_f = jnp.float32(delta)

    def chunk_loss(start):
        pred = pred_ref[pl.ds(start, chunk_rows), :].astype(jnp.float32)
        true = true_ref[pl.ds(start, chunk_rows), :].astype(jnp.float32)
        abs_err = jnp.abs(true - pred)
        quad = jnp.minimum(abs_err, delta_f)
        # Fused branch-free Huber:
        #   quad*(|e| - 0.5*quad) == 0.5*|e|^2            (|e| <= delta)
        #                          == delta*|e| - 0.5*d^2  (|e| >  delta)
        return quad * (abs_err - jnp.float32(0.5) * quad)

    def apply_row_mask(start, loss):
        row_ids = (i * block_rows + start) + lax.broadcasted_iota(
            jnp.int32, (chunk_rows, _LANES), 0)
        # select: garbage (even NaN) in out-of-range rows cannot leak through.
        return jnp.where(row_ids < valid_rows, loss, 0.0)

    def reduce_chunk(loss):
        # Pure-VPU partial reduce down to a single (8, 128) tile.
        return loss.reshape(chunk_rows // _SUBLANES, _SUBLANES, _LANES).sum(axis=0)

    def block_sum(mask):
        def one(start):
            loss = chunk_loss(start)
            if mask:
                loss = apply_row_mask(start, loss)
            return reduce_chunk(loss)

        if n_chunks == 1:
            return one(0)

        def body(c, acc):
            start = pl.multiple_of(c * chunk_rows, chunk_rows)
            return acc + one(start)

        zero = jnp.zeros((_SUBLANES, _LANES), jnp.float32)
        return lax.fori_loop(0, n_chunks, body, zero)

    if valid_rows % block_rows == 0:
        # Every block is full: no masking anywhere (trace-time decision).
        out_ref[...] = block_sum(mask=False)[None]
    else:
        last = pl.num_programs(0) - 1

        @pl.when(i != last)
        def _():
            out_ref[...] = block_sum(mask=False)[None]

        @pl.when(i == last)
        def _():
            out_ref[...] = block_sum(mask=True)[None]


def huber_loss(y_pred, y_true, delta=1.0):
    """Mean Huber loss over all elements, via a streaming Pallas TPU kernel."""
    assert y_pred.shape == y_true.shape
    n_elems = y_pred.size

    pred_flat = jnp.ravel(y_pred)
    true_flat = jnp.ravel(y_true)

    rows = n_elems // _LANES
    tail = n_elems - rows * _LANES
    total = jnp.float32(0.0)

    if rows > 0:
        main = rows * _LANES
        # No jnp.pad pass: lane-aligned sizes (tail == 0) reshape for free; a
        # ragged tail only needs the aligned prefix here.
        pred2d = pred_flat[:main].reshape(rows, _LANES)
        true2d = true_flat[:main].reshape(rows, _LANES)

        block_rows = _choose_block_rows(rows, y_pred.dtype)
        chunk_rows = min(_CHUNK_ROWS, block_rows)
        grid = pl.cdiv(rows, block_rows)

        kernel = functools.partial(
            _huber_block_kernel,
            delta=float(delta),
            block_rows=block_rows,
            chunk_rows=chunk_rows,
            valid_rows=rows,
        )

        partials = pl.pallas_call(
            kernel,
            out_shape=jax.ShapeDtypeStruct((grid, _SUBLANES, _LANES), jnp.float32),
            grid_spec=pltpu.PrefetchScalarGridSpec(
                num_scalar_prefetch=0,
                grid=(grid,),
                in_specs=[
                    pl.BlockSpec((block_rows, _LANES), lambda i: (i, 0)),
                    pl.BlockSpec((block_rows, _LANES), lambda i: (i, 0)),
                ],
                out_specs=pl.BlockSpec((1, _SUBLANES, _LANES), lambda i: (i, 0, 0)),
            ),
            compiler_params=pltpu.CompilerParams(
                dimension_semantics=("parallel",),   # independent blocks -> megacore
                vmem_limit_bytes=40 << 20,
            ),
        )(pred2d, true2d)
        total = total + jnp.sum(partials)

    if tail:
        # Sub-128-element ragged tail: negligible work, do it in plain JAX.
        tp = pred_flat[rows * _LANES:].astype(jnp.float32)
        tt = true_flat[rows * _LANES:].astype(jnp.float32)
        abs_err = jnp.abs(tt - tp)
        quad = jnp.minimum(abs_err, jnp.float32(delta))
        total = total + jnp.sum(quad * (abs_err - 0.5 * quad))

    return total / jnp.float32(n_elems)


def _huber_ref(y_pred, y_true, delta=1.0):
    err = y_true.astype(jnp.float32) - y_pred.astype(jnp.float32)
    abs_err = jnp.abs(err)
    quad = jnp.minimum(abs_err, jnp.float32(delta))
    lin = abs_err - quad
    return jnp.mean(0.5 * quad ** 2 + jnp.float32(delta) * lin)


if __name__ == "__main__":
    key = jax.random.PRNGKey(0)

    # Main case: NCHW-style, lane-aligned (2*4*16*16 = 2048 elements).
    k1, k2, k3, k4 = jax.random.split(key, 4)
    shape = (2, 4, 16, 16)
    y_pred = jax.random.normal(k1, shape, dtype=jnp.float32) * 2.0
    y_true = jax.random.normal(k2, shape, dtype=jnp.float32) * 2.0
    loss = jax.block_until_ready(huber_loss(y_pred, y_true, delta=1.0))
    ref = _huber_ref(y_pred, y_true, delta=1.0)
    assert jnp.allclose(loss, ref, rtol=1e-5, atol=1e-6), (loss, ref)

    # Ragged case: exercises the masked last block and the <128-elem tail.
    shape2 = (2, 2137)  # 4274 elems = 33 full lane-rows + 50-elem tail
    y_pred2 = jax.random.normal(k3, shape2, dtype=jnp.float32) * 2.0
    y_true2 = jax.random.normal(k4, shape2, dtype=jnp.float32) * 2.0
    loss2 = jax.block_until_ready(huber_loss(y_pred2, y_true2, delta=1.0))
    ref2 = _huber_ref(y_pred2, y_true2, delta=1.0)
    assert jnp.allclose(loss2, ref2, rtol=1e-5, atol=1e-6), (loss2, ref2)

    print("KERNEL_OK")
</pallas_src>

<mosaic_0001>
module attributes {stable_mosaic.version = 11 : i64} {
  func.func @_huber_block_kernel(%arg0: i32, %arg1: memref<8x128xf32, #tpu.memory_space<vmem>>, %arg2: memref<8x128xf32, #tpu.memory_space<vmem>>, %arg3: memref<1x8x128xf32, #tpu.memory_space<vmem>>) attributes {dimension_semantics = [#tpu.dimension_semantics<parallel>], iteration_bounds = array<i64: 2>, scalar_prefetch = 0 : i64, scratch_operands = 0 : i64, tpu.core_type = #tpu.core_type<tc>, window_params = [{transform_indices = @transform_0, window_bounds = array<i64: 8, 128>}, {transform_indices = @transform_1, window_bounds = array<i64: 8, 128>}, {transform_indices = @transform_2, window_bounds = array<i64: 1, 8, 128>}]} {
    %c0 = arith.constant 0 : index
    %c0_0 = arith.constant 0 : index
    %0 = vector.load %arg1[%c0, %c0_0] : memref<8x128xf32, #tpu.memory_space<vmem>>, vector<8x128xf32>
    %c0_1 = arith.constant 0 : index
    %c0_2 = arith.constant 0 : index
    %1 = vector.load %arg2[%c0_1, %c0_2] : memref<8x128xf32, #tpu.memory_space<vmem>>, vector<8x128xf32>
    %2 = arith.subf %1, %0 : vector<8x128xf32>
    %3 = math.absf %2 : vector<8x128xf32>
    %cst = arith.constant 1.000000e+00 : f32
    %4 = vector.broadcast %cst : f32 to vector<8x128xf32>
    %5 = arith.minimumf %3, %4 : vector<8x128xf32>
    %cst_3 = arith.constant 5.000000e-01 : f32
    %6 = vector.broadcast %cst_3 : f32 to vector<8x128xf32>
    %7 = arith.mulf %6, %5 : vector<8x128xf32>
    %8 = arith.subf %3, %7 : vector<8x128xf32>
    %9 = arith.mulf %5, %8 : vector<8x128xf32>
    %10 = vector.shape_cast %9 : vector<8x128xf32> to vector<1x8x128xf32>
    %cst_4 = arith.constant dense<0.000000e+00> : vector<8x128xf32>
    %11 = vector.multi_reduction <add>, %10, %cst_4 [0] : vector<1x8x128xf32> to vector<8x128xf32>
    %12 = vector.shape_cast %11 : vector<8x128xf32> to vector<1x8x128xf32>
    %c0_5 = arith.constant 0 : index
    %c0_6 = arith.constant 0 : index
    %c0_7 = arith.constant 0 : index
    %13 = vector.load %arg3[%c0_5, %c0_6, %c0_7] : memref<1x8x128xf32, #tpu.memory_space<vmem>>, vector<1x8x128xf32>
    tpu.vector_store %arg3[%c0_5, %c0_6, %c0_7], %12 {strides = array<i32>} : memref<1x8x128xf32, #tpu.memory_space<vmem>>, vector<1x8x128xf32>,
    return
  }
  func.func @transform_0(%arg0: i32) -> (i32, i32) {
    %c0_i32 = arith.constant 0 : i32
    %c0_i32_0 = arith.constant 0 : i32
    return %arg0, %c0_i32 : i32, i32
  }
  func.func @transform_1(%arg0: i32) -> (i32, i32) {
    %c0_i32 = arith.constant 0 : i32
    %c0_i32_0 = arith.constant 0 : i32
    return %arg0, %c0_i32 : i32, i32
  }
  func.func @transform_2(%arg0: i32) -> (i32, i32, i32) {
    %c0_i32 = arith.constant 0 : i32
    %c0_i32_0 = arith.constant 0 : i32
    %c0_i32_1 = arith.constant 0 : i32
    return %arg0, %c0_i32, %c0_i32_0 : i32, i32, i32
  }
}

</mosaic_0001>

<llo_original>
// kernel: tpu_custom_call.1
$region0: #{tpu_custom_call.1}
  #allocation0 [shape = 'u32[]', space=smem, size = 0x4, offset = 0x4, fixed_abs, tag = 'smem constant byte address 0x4 - core index']
  #allocation1 [shape = 'u32[72,128]{1,0:T(1,128)}', space=vmem, size = 0x9000, scoped, tag = 'internal scratch']
  %s0 = inlined_call_operand.hbm [shape: f32[16,128], index: 0, kind: input, shape index: {}]
  %s1 = inlined_call_operand.hbm [shape: f32[16,128], index: 1, kind: input, shape index: {}]
  %s2 = inlined_call_operand.hbm [shape: f32[2,8,128], index: 2, kind: output, shape index: {}]
  %s3 = sld [smem:[#allocation0]]
  $region49: #{tpu_custom_call.1} parent=0
    _
  %s5 = ssub.s32 1, %s3
  %s6 = scalar_select 0, %s5, %s3
  $region1: #{tpu_custom_call.1} parent=0
    #allocation2 [shape = 'u8[8192]{0}', space=vmem, size = 0x2000, scoped, tag = 'input window, operand 0']
    #allocation3 [shape = 's32[2]{0}', space=sflag, size = 0x8, scoped, tag = 'scoped memory for tpu_custom_call.1']
    #allocation4 [shape = 's32[2]{0}', space=sflag, size = 0x8, scoped, tag = 'scoped memory for tpu_custom_call.1']
    #allocation5 [shape = 'u8[8192]{0}', space=vmem, size = 0x2000, scoped, tag = 'input window, operand 1']
    #allocation6 [shape = 's32[2]{0}', space=sflag, size = 0x8, scoped, tag = 'scoped memory for tpu_custom_call.1']
    #allocation7 [shape = 'u8[8192]{0}', space=vmem, size = 0x2000, scoped, tag = 'output window, operand 0']
    %7 = vsyncpa [#allocation3], 0
    %s8 = scalar_lea.sflag [#allocation3], 1
    %9 = vsyncpa %s8, 0
    %10 = vsyncpa [#allocation6], 0
    %s11 = scalar_lea.sflag [#allocation6], 1
    %12 = vsyncpa %s11, 0
    %13 = vsyncpa [#allocation4], 0
    %s14 = scalar_lea.sflag [#allocation4], 1
    %15 = vsyncpa %s14, 0
    loop: start=0, step=1, limit=4
    $region2: #{tpu_custom_call.1} parent=1 // loop_pre_header
      _
    $region3: #{tpu_custom_call.1} parent=1 // loop_header
      %s17 = sphi 0, %s21
      %p18 = scmp.ge.s32.totalorder %s17, 4
      %s27 = sphi 0, %s29
      %s30 = sphi 0, %s27
      %s31 = sphi 0, %s30
      %s47 = sphi 0, %s31
      %s53 = sphi 0, %s55
      %s56 = sphi 0, %s53
      %s57 = sphi 0, %s56
      %s73 = sphi 0, %s57
      %s79 = sphi 0, %s81
      %s82 = sphi 0, %s79
      %s83 = sphi 0, %s82
      %s99 = sphi 0, %s83
    $region4: #{tpu_custom_call.1} parent=1 // loop_header_branch
      %20 = sbr.rel (%p18) target = $region8
    $region5: #{tpu_custom_call.1} parent=1 // loop_body
      %s22 = ssub.s32 %s17, 1
      %s23 = ssub.s32 %s17, 2
      %s24 = sadd.s32 %s17, 1
      %s25 = ssub.s32 %s17, %s24
      %p26 = scmp.eq.s32.totalorder %s25, 0
      %s28 = sadd.s32 %s27, 1
      %s29 = scalar_select %p26, %s27, %s28
      %p32 = pneg %p26
      %p33 = scmp.eq.s32.totalorder %s17, 1
      %p34 = por %p32, %p33
      %p35 = scmp.ne.s32.totalorder %s27, %s30
      %p36 = scmp.eq.s32.totalorder %s17, 0
      %p37 = por %p35, %p36
      %p38 = scmp.ne.s32.totalorder %s27, %s30
      %p39 = scmp.eq.s32.totalorder %s22, 1
      %p40 = por %p38, %p39
      %p41 = scmp.ne.s32.totalorder %s30, %s31
      %p42 = scmp.eq.s32.totalorder %s22, 0
      %p43 = por %p41, %p42
      %p44 = scmp.ne.s32.totalorder %s30, %s31
      %p45 = scmp.eq.s32.totalorder %s23, 1
      %p46 = por %p44, %p45
      %p48 = scmp.ne.s32.totalorder %s31, %s47
      %p49 = scmp.eq.s32.totalorder %s23, 0
      %p50 = por %p48, %p49
      %s51 = ssub.s32 %s17, %s24
      %p52 = scmp.eq.s32.totalorder %s51, 0
      %s54 = sadd.s32 %s53, 1
      %s55 = scalar_select %p52, %s53, %s54
      %p58 = pneg %p52
      %p59 = scmp.eq.s32.totalorder %s17, 1
      %p60 = por %p58, %p59
      %p61 = scmp.ne.s32.totalorder %s53, %s56
      %p62 = scmp.eq.s32.totalorder %s17, 0
      %p63 = por %p61, %p62
      %p64 = scmp.ne.s32.totalorder %s53, %s56
      %p65 = scmp.eq.s32.totalorder %s22, 1
      %p66 = por %p64, %p65
      %p67 = scmp.ne.s32.totalorder %s56, %s57
      %p68 = scmp.eq.s32.totalorder %s22, 0
      %p69 = por %p67, %p68
      %p70 = scmp.ne.s32.totalorder %s56, %s57
      %p71 = scmp.eq.s32.totalorder %s23, 1
      %p72 = por %p70, %p71
      %p74 = scmp.ne.s32.totalorder %s57, %s73
      %p75 = scmp.eq.s32.totalorder %s23, 0
      %p76 = por %p74, %p75
      %s77 = ssub.s32 %s17, %s24
      %p78 = scmp.eq.s32.totalorder %s77, 0
      %s80 = sadd.s32 %s79, 1
      %s81 = scalar_select %p78, %s79, %s80
      %p84 = pneg %p78
      %p85 = scmp.eq.s32.totalorder %s17, 1
      %p86 = por %p84, %p85
      %p87 = scmp.ne.s32.totalorder %s79, %s82
      %p88 = scmp.eq.s32.totalorder %s17, 0
      %p89 = por %p87, %p88
      %p90 = scmp.ne.s32.totalorder %s79, %s82
      %p91 = scmp.eq.s32.totalorder %s22, 1
      %p92 = por %p90, %p91
      %p93 = scmp.ne.s32.totalorder %s82, %s83
      %p94 = scmp.eq.s32.totalorder %s22, 0
      %p95 = por %p93, %p94
      %p96 = scmp.ne.s32.totalorder %s82, %s83
      %p97 = scmp.eq.s32.totalorder %s23, 1
      %p98 = por %p96, %p97
      %p100 = scmp.ne.s32.totalorder %s83, %s99
      %p101 = scmp.eq.s32.totalorder %s23, 0
      %p102 = por %p100, %p101
      %p103 = scmp.le.s32.totalorder 1, %s17
      %p104 = scmp.lt.s32.totalorder %s17, 3
      %p105 = pnand %p103, %p104
      %p106 = pneg %p105
      // Predicated region
      $region9: #{tpu_custom_call.1} parent=5 // pred_check
        _
      $region10: #{tpu_custom_call.1} parent=5 // pred_check_branch
        %108 = sbr.rel (%p105) target = $region12
      $region11: #{tpu_custom_call.1} parent=5 // pred_region
        %s109 = ssub.s32 %s17, 1
      $region12: #{tpu_custom_call.1} parent=5 // pred_fallthru
        _
      %p110 = scmp.lt.s32.totalorder %s17, 2
      // Predicated region
      $region13: #{tpu_custom_call.1} parent=5 // pred_check
        %p111 = pneg %p110
      $region14: #{tpu_custom_call.1} parent=5 // pred_check_branch
        %113 = sbr.rel (%p111) target = $region16
      $region15: #{tpu_custom_call.1} parent=5 // pred_region
        // Predicated region
        $region17: #{tpu_custom_call.1} parent=15 // pred_check
          %p114 = pneg %p37
        $region18: #{tpu_custom_call.1} parent=15 // pred_check_branch
          %116 = sbr.rel (%p114) target = $region20
        $region19: #{tpu_custom_call.1} parent=15 // pred_region
          %s117 = sand.u32 %s27, 1
          %s118 = scalar_lea.sflag [#allocation3], %s117
          %s119 = sand.u32 %s27, 1
          %s120 = smul.addr %s119, 8
          %s121 = scalar_lea.vmem [#allocation2], %s120
          %123 = vsyncadd %s118, 0
          %s124 = smul.addr %s17, 8
          %s125 = scalar_lea.hbm %s0, %s124
          %s127 = sshll.u32 %s125, 4
          %s128 = int_to_ptr.hbm [resolvable:$true] %s127
          %s129 = sshll.u32 %s121, 4
          %s130 = int_to_ptr.vmem [resolvable:$true] %s129
          %132 = dma.hbm_to_vmem [thread:$0]  %s128, 128, %s130, %s118
        $region20: #{tpu_custom_call.1} parent=15 // pred_fallthru
          _
        // Predicated region
        $region21: #{tpu_custom_call.1} parent=15 // pred_check
          %p133 = pneg %p63
        $region22: #{tpu_custom_call.1} parent=15 // pred_check_branch
          %135 = sbr.rel (%p133) target = $region24
        $region23: #{tpu_custom_call.1} parent=15 // pred_region
          %s136 = sand.u32 %s53, 1
          %s137 = scalar_lea.sflag [#allocation6], %s136
          %s138 = sand.u32 %s53, 1
          %s139 = smul.addr %s138, 8
          %s140 = scalar_lea.vmem [#allocation5], %s139
          %142 = vsyncadd %s137, 0
          %s143 = smul.addr %s17, 8
          %s144 = scalar_lea.hbm %s1, %s143
          %s146 = sshll.u32 %s144, 4
          %s147 = int_to_ptr.hbm [resolvable:$true] %s146
          %s148 = sshll.u32 %s140, 4
          %s149 = int_to_ptr.vmem [resolvable:$true] %s148
          %151 = dma.hbm_to_vmem [thread:$0]  %s147, 128, %s149, %s137
        $region24: #{tpu_custom_call.1} parent=15 // pred_fallthru
          _
      $region16: #{tpu_custom_call.1} parent=5 // pred_fallthru
        _
      %p152 = scmp.le.s32.totalorder 1, %s17
      %p153 = scmp.lt.s32.totalorder %s17, 3
      %p154 = pnand %p152, %p153
      %p155 = pneg %p154
      // Predicated region
      $region25: #{tpu_custom_call.1} parent=5 // pred_check
        _
      $region26: #{tpu_custom_call.1} parent=5 // pred_check_branch
        %157 = sbr.rel (%p154) target = $region28
      $region27: #{tpu_custom_call.1} parent=5 // pred_region
        %s158 = ssub.s32 %s17, 1
        %s159 = sand.u32 %s30, 1
        %s160 = scalar_lea.sflag [#allocation3], %s159
        %s161 = sand.u32 %s30, 1
        %s162 = smul.addr %s161, 8
        %s163 = scalar_lea.vmem [#allocation2], %s162
        // Predicated region
        $region29: #{tpu_custom_call.1} parent=27 // pred_check
          %p164 = pneg %p43
        $region30: #{tpu_custom_call.1} parent=27 // pred_check_branch
          %166 = sbr.rel (%p164) target = $region32
        $region31: #{tpu_custom_call.1} parent=27 // pred_region
          %168 = dma.done %s160, 128
        $region32: #{tpu_custom_call.1} parent=27 // pred_fallthru
          _
        %s169 = sand.u32 %s56, 1
        %s170 = scalar_lea.sflag [#allocation6], %s169
        %s171 = sand.u32 %s56, 1
        %s172 = smul.addr %s171, 8
        %s173 = scalar_lea.vmem [#allocation5], %s172
        // Predicated region
        $region33: #{tpu_custom_call.1} parent=27 // pred_check
          %p174 = pneg %p69
        $region34: #{tpu_custom_call.1} parent=27 // pred_check_branch
          %176 = sbr.rel (%p174) target = $region36
        $region35: #{tpu_custom_call.1} parent=27 // pred_region
          %178 = dma.done %s170, 128
        $region36: #{tpu_custom_call.1} parent=27 // pred_fallthru
          _
        %s179 = sand.u32 %s30, 1
        %s180 = scalar_lea.sflag [#allocation3], %s179
        %s181 = sand.u32 %s30, 1
        %s182 = smul.addr %s181, 8
        %s183 = scalar_lea.vmem [#allocation2], %s182
        %p184 = pneg %p43
        %p185 = pneg %p40
        %s186 = sand.u32 %s56, 1
        %s187 = scalar_lea.sflag [#allocation6], %s186
        %s188 = sand.u32 %s56, 1
        %s189 = smul.addr %s188, 8
        %s190 = scalar_lea.vmem [#allocation5], %s189
        %p191 = pneg %p69
        %p192 = pneg %p66
        %p193 = pneg %p95
        %p194 = pneg %p92
        %s195 = sand.u32 %s82, 1
        %s196 = scalar_lea.sflag [#allocation4], %s195
        %s197 = sand.u32 %s82, 1
        %s198 = smul.addr %s197, 8
        %s199 = scalar_lea.vmem [#allocation7], %s198
        %v200 = vld [vmem:[%s163] sm:$0xff]
        %v201 = vld [vmem:[%s173] sm:$0xff]
        %v202 = vsub.f32 %v201, %v200
        %v203 = vand.u32 2147483647, %v202
        %v204 = vmin.f32 %v203, 1.0
        %v205 = vmul.f32 %v204, 0.5
        %v206 = vsub.f32 %v203, %v205
        %v207 = vmul.f32 %v204, %v206
        %v208 = vadd.f32 %v207, 0.0
        %209 = vst [vmem:[%s199] sm:$0xff] %v208
        %s210 = sand.u32 %s82, 1
        %s211 = scalar_lea.sflag [#allocation4], %s210
        %s212 = sand.u32 %s82, 1
        %s213 = smul.addr %s212, 8
        %s214 = scalar_lea.vmem [#allocation7], %s213
        // Predicated region
        $region37: #{tpu_custom_call.1} parent=27 // pred_check
          %p215 = pneg %p92
        $region38: #{tpu_custom_call.1} parent=27 // pred_check_branch
          %217 = sbr.rel (%p215) target = $region40
        $region39: #{tpu_custom_call.1} parent=27 // pred_region
          %219 = vsyncadd %s211, 0
          %s220 = smul.addr %s22, 8
          %s221 = scalar_lea.hbm %s2, %s220
          %s223 = sshll.u32 %s214, 4
          %s224 = int_to_ptr.vmem [resolvable:$true] %s223
          %s225 = sshll.u32 %s221, 4
          %s226 = int_to_ptr.hbm [resolvable:$true] %s225
          %228 = dma.vmem_to_hbm [thread:$0]  %s224, 128, %s226, %s211
        $region40: #{tpu_custom_call.1} parent=27 // pred_fallthru
          _
      $region28: #{tpu_custom_call.1} parent=5 // pred_fallthru
        _
      %p229 = scmp.le.s32.totalorder 2, %s17
      // Predicated region
      $region41: #{tpu_custom_call.1} parent=5 // pred_check
        %p230 = pneg %p229
      $region42: #{tpu_custom_call.1} parent=5 // pred_check_branch
        %232 = sbr.rel (%p230) target = $region44
      $region43: #{tpu_custom_call.1} parent=5 // pred_region
        %s233 = ssub.s32 %s17, 2
        // Predicated region
        $region45: #{tpu_custom_call.1} parent=43 // pred_check
          %p234 = pneg %p98
        $region46: #{tpu_custom_call.1} parent=43 // pred_check_branch
          %236 = sbr.rel (%p234) target = $region48
        $region47: #{tpu_custom_call.1} parent=43 // pred_region
          %s237 = sand.u32 %s83, 1
          %s238 = scalar_lea.sflag [#allocation4], %s237
          %s239 = sand.u32 %s83, 1
          %s240 = smul.addr %s239, 8
          %s241 = scalar_lea.vmem [#allocation7], %s240
          %243 = dma.done %s238, 128
        $region48: #{tpu_custom_call.1} parent=43 // pred_fallthru
          _
      $region44: #{tpu_custom_call.1} parent=5 // pred_fallthru
        _
    $region6: #{tpu_custom_call.1} parent=1 // loop_footer
      %s21 = sadd.s32 1, %s17
    $region7: #{tpu_custom_call.1} parent=1 // loop_footer_branch
      %16 = sbr.rel target = $region3
    $region8: #{tpu_custom_call.1} parent=1 // loop_exit
      _
    %244 = vsyncpa [#allocation3], 1
    %s245 = scalar_lea.sflag [#allocation3], 1
    %246 = vsyncpa %s245, 1
    %247 = vsyncpa [#allocation6], 1
    %s248 = scalar_lea.sflag [#allocation6], 1
    %249 = vsyncpa %s248, 1
    %250 = vsyncpa [#allocation4], 1
    %s251 = scalar_lea.sflag [#allocation4], 1
    %252 = vsyncpa %s251, 1

</llo_original>
